<compile_context>
chip_gen: v7x
topology: tpu7x:2x2x1
jax: 0.10.0
libtpu: 0.0.40
codegen_flags: <defaults>
</compile_context>

<pallas_src>
import jax
import jax.numpy as jnp
from jax import lax
from jax.experimental import pallas as pl
from jax.experimental.pallas import tpu as pltpu

EPS_BN = 1e-5
LEAKY_SLOPE = 0.2
H1 = 256
H2 = 128


def _leaky_relu(x):
    # max(x, 0.2*x) == LeakyReLU(0.2) for slope in (0, 1); single VALU op.
    return jnp.maximum(x, LEAKY_SLOPE * x)


def _batchnorm_train_fused(x, gamma, beta):
    """BatchNorm1d training-mode: one-pass stats, gamma folded into scale/shift,
    variance clamped at 0 to guard against FP cancellation (mean >> std)."""
    inv_b = 1.0 / x.shape[0]
    s = jnp.sum(x, axis=0, keepdims=True)
    s2 = jnp.sum(x * x, axis=0, keepdims=True)
    mu = s * inv_b
    var = jnp.maximum(s2 * inv_b - mu * mu, 0.0)   # biased var, clamped
    scale = gamma * lax.rsqrt(var + EPS_BN)
    return x * scale + (beta - mu * scale)


def discriminator_kernel(
    xa_ref,      # (M, E)   f32   emb_active   (real+fake stacked along M)
    xb_ref,      # (M, E)   f32   emb_passive  (real+fake stacked along M)
    w1_ref,      # (2E, 256) bf16 layer-1 weight (in, out), spectral-normalized
    w2_ref,      # (256, 128) bf16 layer-2 weight (in, out), spectral-normalized
    vec_ref,     # (8, 256) f32   packed slab: b1,g1,be1,b2,g2,be2,w3_row,b3
    o_ref,       # (M, 1)   f32
):
    # Unpack the parameter slab (static, cheap slices of a VMEM ref).
    b1 = vec_ref[0:1, :]              # (1, 256)
    g1 = vec_ref[1:2, :]
    be1 = vec_ref[2:3, :]
    b2 = vec_ref[3:4, :H2]            # (1, 128)
    g2 = vec_ref[4:5, :H2]
    be2 = vec_ref[5:6, :H2]
    w3_row = vec_ref[6:7, :H2]        # (1, 128)
    b3 = vec_ref[7:8, 0:1]            # (1, 1)

    # Layer 1: in-kernel lane concat (XLU, otherwise idle) -> ONE K=2E bf16 dot
    # against the full W1 ref (no sublane weight slices) -> LeakyReLU -> BN(256).
    x = jnp.concatenate([xa_ref[...], xb_ref[...]], axis=1).astype(jnp.bfloat16)
    h = jnp.dot(x, w1_ref[...], preferred_element_type=jnp.float32) + b1
    h = _leaky_relu(h)
    h = _batchnorm_train_fused(h, g1, be1)

    # Layer 2: bf16 MXU dot, f32 accumulate -> LeakyReLU -> BN(128).
    h = jnp.dot(h.astype(jnp.bfloat16), w2_ref[...],
                preferred_element_type=jnp.float32) + b2
    h = _leaky_relu(h)
    h = _batchnorm_train_fused(h, g2, be2)

    # Layer 3 (128 -> 1): VPU multiply + lane reduce (skip the N=1 MXU matmul),
    # sigmoid with EUP exp + EUP approx reciprocal (VALU stays free).
    logit = jnp.sum(h * w3_row, axis=-1, keepdims=True) + b3       # (M, 1)
    o_ref[...] = pl.reciprocal(1.0 + jnp.exp(-logit), approx=True)
    # TODO(synk): if M ever scales into the thousands, emit a lane-dense
    # (ceil(M/128), 128) logit slab instead of this (M, 1) column (avoids
    # masked vst.msk partial stores); negligible at M=16.


def spectral_normalize(w, key):
    """One power iteration (PyTorch spectral_norm, n_power_iterations=1) on a
    PyTorch-layout weight w of shape (out, in), with a deterministic u."""
    out_dim = w.shape[0]
    u = jax.random.normal(key, (out_dim,), dtype=jnp.float32)
    u = u / (jnp.linalg.norm(u) + 1e-12)
    v = w.T @ u
    v = v / (jnp.linalg.norm(v) + 1e-12)
    u = w @ v
    u = u / (jnp.linalg.norm(u) + 1e-12)
    sigma = u @ (w @ v)
    return w / sigma


def init_params(emb_dim, key):
    """Deterministic synthetic parameters with the module's shapes.
    Returns the packed kernel operands (bf16 matmul weights, f32 slab) and the
    raw stored parameters (bf16-rounded, as f32) for the plain-JAX reference."""
    assert H2 <= H1, "slab packing assumes layer-2 width <= layer-1 width"
    d_in = emb_dim * 2
    ks = jax.random.split(key, 12)

    def linear(k_w, k_b, k_u, fan_in, fan_out):
        bound = 1.0 / jnp.sqrt(fan_in)
        w = jax.random.uniform(k_w, (fan_out, fan_in), jnp.float32, -bound, bound)
        b = jax.random.uniform(k_b, (fan_out,), jnp.float32, -bound, bound)
        w = spectral_normalize(w, k_u)          # spectral_norm wrapper
        return w.T, b                           # store as (in, out) for x @ W

    w1_f32, b1 = linear(ks[0], ks[1], ks[2], d_in, H1)
    w2_f32, b2 = linear(ks[3], ks[4], ks[5], H1, H2)
    w3_f32, b3 = linear(ks[6], ks[7], ks[8], H2, 1)

    # bf16 storage for the two big matmul weights (halves the dominant DMA,
    # native MXU path). The bf16-rounded values ARE the model parameters; the
    # reference uses the same rounded values (cast back to f32).
    w1 = w1_f32.astype(jnp.bfloat16)
    w2 = w2_f32.astype(jnp.bfloat16)

    # BatchNorm affine params (perturbed around PyTorch init 1 / 0).
    g1 = 1.0 + 0.1 * jax.random.normal(ks[9], (H1,), jnp.float32)
    be1 = 0.1 * jax.random.normal(ks[10], (H1,), jnp.float32)
    g2 = 1.0 + 0.1 * jax.random.normal(ks[11], (H2,), jnp.float32)
    be2 = jnp.zeros((H2,), jnp.float32)

    # Pack all small per-feature vectors into a single (8, H1) f32 slab (one DMA).
    slab = jnp.zeros((8, H1), jnp.float32)
    slab = slab.at[0, :].set(b1)
    slab = slab.at[1, :].set(g1)
    slab = slab.at[2, :].set(be1)
    slab = slab.at[3, :H2].set(b2)
    slab = slab.at[4, :H2].set(g2)
    slab = slab.at[5, :H2].set(be2)
    slab = slab.at[6, :H2].set(w3_f32.reshape(H2))
    slab = slab.at[7, 0].set(b3.reshape(())[()])

    kernel_params = dict(w1=w1, w2=w2, vec_slab=slab)
    raw = dict(w1=w1.astype(jnp.float32), b1=b1, g1=g1, be1=be1,
               w2=w2.astype(jnp.float32), b2=b2, g2=g2, be2=be2,
               w3=w3_f32, b3=b3)
    return kernel_params, raw


@jax.jit
def discriminator_forward(emb_active, emb_passive, w1, w2, vec_slab):
    M, E = emb_active.shape
    vmem = pl.BlockSpec(memory_space=pltpu.MemorySpace.VMEM)
    cost = pl.CostEstimate(
        flops=2 * M * (2 * E * H1 + H1 * H2 + H2),
        transcendentals=2 * M,                       # exp + reciprocal per row
        bytes_accessed=(w1.size * w1.dtype.itemsize
                        + w2.size * w2.dtype.itemsize
                        + vec_slab.size * 4
                        + emb_active.size * 4 + emb_passive.size * 4
                        + M * 4),
    )
    return pl.pallas_call(
        discriminator_kernel,
        out_shape=jax.ShapeDtypeStruct((M, 1), jnp.float32),
        in_specs=[vmem] * 5,
        out_specs=vmem,
        cost_estimate=cost,
        # Gridless: one TensorCore, all operands (<100 KiB) VMEM-resident.
        # If the batch scales: grid=(pl.cdiv(M, TB),) with constant index_maps
        # for w1/w2/vec_slab (weights fetched once, stay resident),
        # dimension_semantics=("parallel",) to use v7x's 2nd TC, and set
        # vmem_limit_bytes explicitly against v7x's 32 MiB scoped / v5e's
        # 16 MiB scoped VMEM defaults rather than reusing a v6e tile.
    )(emb_active, emb_passive, w1, w2, vec_slab)


def reference_forward(emb_active, emb_passive, raw):
    """Plain-JAX reference of the PyTorch forward (train-mode BN, exact sigmoid),
    using the same stored (bf16-rounded) parameters in full f32 math."""
    def bn(x, gamma, beta):
        mu = jnp.mean(x, axis=0, keepdims=True)
        var = jnp.mean((x - mu) ** 2, axis=0, keepdims=True)
        return (x - mu) * lax.rsqrt(var + EPS_BN) * gamma + beta

    x = jnp.concatenate([emb_active, emb_passive], axis=1)
    h = x @ raw["w1"] + raw["b1"]
    h = jnp.where(h > 0, h, LEAKY_SLOPE * h)
    h = bn(h, raw["g1"], raw["be1"])
    h = h @ raw["w2"] + raw["b2"]
    h = jnp.where(h > 0, h, LEAKY_SLOPE * h)
    h = bn(h, raw["g2"], raw["be2"])
    logit = h @ raw["w3"] + raw["b3"]
    return jax.nn.sigmoid(logit)


if __name__ == "__main__":
    emb_dim = 16
    batch = 8   # per-forward batch; real + fake stacked below into one call

    key = jax.random.PRNGKey(0)
    k_a, k_p, k_perm, k_params = jax.random.split(key, 4)

    emb_active = jax.random.normal(k_a, (batch, emb_dim), dtype=jnp.float32)
    emb_passive = jax.random.normal(k_p, (batch, emb_dim), dtype=jnp.float32)
    # "Fake" pairing the GAN loop would feed to the discriminator's second
    # forward: shuffled passive embeddings.
    emb_passive_fake = emb_passive[jax.random.permutation(k_perm, batch)]

    kernel_params, raw = init_params(emb_dim, k_params)

    # Amortize launch + weight DMA: stack the real and fake batches along M and
    # run ONE pallas_call. BN stats span the stacked batch — exactly what the
    # PyTorch module computes when called once on this stacked input.
    xa = jnp.concatenate([emb_active, emb_active], axis=0)        # (2B, E)
    xb = jnp.concatenate([emb_passive, emb_passive_fake], axis=0)  # (2B, E)

    out = discriminator_forward(
        xa, xb,
        kernel_params["w1"], kernel_params["w2"], kernel_params["vec_slab"],
    )
    out = jax.block_until_ready(out)

    ref = reference_forward(xa, xb, raw)
    assert out.shape == (2 * batch, 1)
    assert bool(jnp.all(jnp.isfinite(out)))
    assert bool(jnp.all((out >= 0.0) & (out <= 1.0)))
    # Tolerance covers bf16 activation casting in the two dots, one-pass BN
    # stats, and the EUP approx-reciprocal sigmoid.
    assert jnp.allclose(out, ref, atol=1.5e-2, rtol=1.5e-2), (
        f"max abs err {float(jnp.max(jnp.abs(out - ref)))}"
    )

    print("KERNEL_OK")
</pallas_src>

<mosaic_0001>
module attributes {stable_mosaic.version = 11 : i64} {
  func.func @discriminator_kernel(%arg0: memref<16x16xf32, #tpu.memory_space<vmem>>, %arg1: memref<16x16xf32, #tpu.memory_space<vmem>>, %arg2: memref<32x256xbf16, #tpu.memory_space<vmem>>, %arg3: memref<256x128xbf16, #tpu.memory_space<vmem>>, %arg4: memref<8x256xf32, #tpu.memory_space<vmem>>, %arg5: memref<16x1xf32, #tpu.memory_space<vmem>>) attributes {dimension_semantics = [], scalar_prefetch = 0 : i64, scratch_operands = 0 : i64, tpu.core_type = #tpu.core_type<tc>} {
    %c0 = arith.constant 0 : index
    %c0_0 = arith.constant 0 : index
    %0 = vector.load %arg4[%c0, %c0_0] : memref<8x256xf32, #tpu.memory_space<vmem>>, vector<1x256xf32>
    %c1 = arith.constant 1 : index
    %c0_1 = arith.constant 0 : index
    %1 = vector.load %arg4[%c1, %c0_1] : memref<8x256xf32, #tpu.memory_space<vmem>>, vector<1x256xf32>
    %c2 = arith.constant 2 : index
    %c0_2 = arith.constant 0 : index
    %2 = vector.load %arg4[%c2, %c0_2] : memref<8x256xf32, #tpu.memory_space<vmem>>, vector<1x256xf32>
    %c3 = arith.constant 3 : index
    %c0_3 = arith.constant 0 : index
    %3 = vector.load %arg4[%c3, %c0_3] : memref<8x256xf32, #tpu.memory_space<vmem>>, vector<1x128xf32>
    %c4 = arith.constant 4 : index
    %c0_4 = arith.constant 0 : index
    %4 = vector.load %arg4[%c4, %c0_4] : memref<8x256xf32, #tpu.memory_space<vmem>>, vector<1x128xf32>
    %c5 = arith.constant 5 : index
    %c0_5 = arith.constant 0 : index
    %5 = vector.load %arg4[%c5, %c0_5] : memref<8x256xf32, #tpu.memory_space<vmem>>, vector<1x128xf32>
    %c6 = arith.constant 6 : index
    %c0_6 = arith.constant 0 : index
    %6 = vector.load %arg4[%c6, %c0_6] : memref<8x256xf32, #tpu.memory_space<vmem>>, vector<1x128xf32>
    %c7 = arith.constant 7 : index
    %c0_7 = arith.constant 0 : index
    %7 = vector.load %arg4[%c7, %c0_7] : memref<8x256xf32, #tpu.memory_space<vmem>>, vector<1x1xf32>
    %c0_8 = arith.constant 0 : index
    %c0_9 = arith.constant 0 : index
    %8 = vector.load %arg0[%c0_8, %c0_9] : memref<16x16xf32, #tpu.memory_space<vmem>>, vector<16x16xf32>
    %c0_10 = arith.constant 0 : index
    %c0_11 = arith.constant 0 : index
    %9 = vector.load %arg1[%c0_10, %c0_11] : memref<16x16xf32, #tpu.memory_space<vmem>>, vector<16x16xf32>
    %10 = tpu.concatenate %8, %9 in 1 : vector<16x16xf32>, vector<16x16xf32> -> vector<16x32xf32>
    %11 = arith.truncf %10 : vector<16x32xf32> to vector<16x32xbf16>
    %c0_12 = arith.constant 0 : index
    %c0_13 = arith.constant 0 : index
    %12 = vector.load %arg2[%c0_12, %c0_13] : memref<32x256xbf16, #tpu.memory_space<vmem>>, vector<32x256xbf16>
    %cst = arith.constant dense<0.000000e+00> : vector<16x256xf32>
    %13 = tpu.matmul %11, %12, %cst {dimension_numbers = #tpu.dot_dimension_numbers<[1], [0], [0], [1], [0, 0, 1, 1], [], []>} : vector<16x32xbf16>, vector<32x256xbf16>, vector<16x256xf32> -> vector<16x256xf32>
    %14 = vector.broadcast %0 : vector<1x256xf32> to vector<16x256xf32>
    %15 = arith.addf %13, %14 : vector<16x256xf32>
    %cst_14 = arith.constant 2.000000e-01 : f32
    %16 = vector.broadcast %cst_14 : f32 to vector<16x256xf32>
    %17 = arith.mulf %16, %15 : vector<16x256xf32>
    %18 = arith.maximumf %15, %17 : vector<16x256xf32>
    %cst_15 = arith.constant dense<0.000000e+00> : vector<256xf32>
    %19 = vector.multi_reduction <add>, %18, %cst_15 [0] : vector<16x256xf32> to vector<256xf32>
    %20 = vector.shape_cast %19 : vector<256xf32> to vector<1x256xf32>
    %21 = arith.mulf %18, %18 : vector<16x256xf32>
    %cst_16 = arith.constant dense<0.000000e+00> : vector<256xf32>
    %22 = vector.multi_reduction <add>, %21, %cst_16 [0] : vector<16x256xf32> to vector<256xf32>
    %23 = vector.shape_cast %22 : vector<256xf32> to vector<1x256xf32>
    %cst_17 = arith.constant 6.250000e-02 : f32
    %24 = vector.broadcast %cst_17 : f32 to vector<1x256xf32>
    %25 = arith.mulf %20, %24 : vector<1x256xf32>
    %cst_18 = arith.constant 6.250000e-02 : f32
    %26 = vector.broadcast %cst_18 : f32 to vector<1x256xf32>
    %27 = arith.mulf %23, %26 : vector<1x256xf32>
    %28 = arith.mulf %25, %25 : vector<1x256xf32>
    %29 = arith.subf %27, %28 : vector<1x256xf32>
    %cst_19 = arith.constant 0.000000e+00 : f32
    %30 = vector.broadcast %cst_19 : f32 to vector<1x256xf32>
    %31 = arith.maximumf %29, %30 : vector<1x256xf32>
    %cst_20 = arith.constant 9.99999974E-6 : f32
    %32 = vector.broadcast %cst_20 : f32 to vector<1x256xf32>
    %33 = arith.addf %31, %32 : vector<1x256xf32>
    %34 = math.rsqrt %33 : vector<1x256xf32>
    %35 = arith.mulf %1, %34 : vector<1x256xf32>
    %36 = vector.broadcast %35 : vector<1x256xf32> to vector<16x256xf32>
    %37 = arith.mulf %18, %36 : vector<16x256xf32>
    %38 = arith.mulf %25, %35 : vector<1x256xf32>
    %39 = arith.subf %2, %38 : vector<1x256xf32>
    %40 = vector.broadcast %39 : vector<1x256xf32> to vector<16x256xf32>
    %41 = arith.addf %37, %40 : vector<16x256xf32>
    %42 = arith.truncf %41 : vector<16x256xf32> to vector<16x256xbf16>
    %c0_21 = arith.constant 0 : index
    %c0_22 = arith.constant 0 : index
    %43 = vector.load %arg3[%c0_21, %c0_22] : memref<256x128xbf16, #tpu.memory_space<vmem>>, vector<256x128xbf16>
    %cst_23 = arith.constant dense<0.000000e+00> : vector<16x128xf32>
    %44 = tpu.matmul %42, %43, %cst_23 {dimension_numbers = #tpu.dot_dimension_numbers<[1], [0], [0], [1], [0, 0, 1, 1], [], []>} : vector<16x256xbf16>, vector<256x128xbf16>, vector<16x128xf32> -> vector<16x128xf32>
    %45 = vector.broadcast %3 : vector<1x128xf32> to vector<16x128xf32>
    %46 = arith.addf %44, %45 : vector<16x128xf32>
    %cst_24 = arith.constant 2.000000e-01 : f32
    %47 = vector.broadcast %cst_24 : f32 to vector<16x128xf32>
    %48 = arith.mulf %47, %46 : vector<16x128xf32>
    %49 = arith.maximumf %46, %48 : vector<16x128xf32>
    %cst_25 = arith.constant dense<0.000000e+00> : vector<128xf32>
    %50 = vector.multi_reduction <add>, %49, %cst_25 [0] : vector<16x128xf32> to vector<128xf32>
    %51 = vector.shape_cast %50 : vector<128xf32> to vector<1x128xf32>
    %52 = arith.mulf %49, %49 : vector<16x128xf32>
    %cst_26 = arith.constant dense<0.000000e+00> : vector<128xf32>
    %53 = vector.multi_reduction <add>, %52, %cst_26 [0] : vector<16x128xf32> to vector<128xf32>
    %54 = vector.shape_cast %53 : vector<128xf32> to vector<1x128xf32>
    %cst_27 = arith.constant 6.250000e-02 : f32
    %55 = vector.broadcast %cst_27 : f32 to vector<1x128xf32>
    %56 = arith.mulf %51, %55 : vector<1x128xf32>
    %cst_28 = arith.constant 6.250000e-02 : f32
    %57 = vector.broadcast %cst_28 : f32 to vector<1x128xf32>
    %58 = arith.mulf %54, %57 : vector<1x128xf32>
    %59 = arith.mulf %56, %56 : vector<1x128xf32>
    %60 = arith.subf %58, %59 : vector<1x128xf32>
    %cst_29 = arith.constant 0.000000e+00 : f32
    %61 = vector.broadcast %cst_29 : f32 to vector<1x128xf32>
    %62 = arith.maximumf %60, %61 : vector<1x128xf32>
    %cst_30 = arith.constant 9.99999974E-6 : f32
    %63 = vector.broadcast %cst_30 : f32 to vector<1x128xf32>
    %64 = arith.addf %62, %63 : vector<1x128xf32>
    %65 = math.rsqrt %64 : vector<1x128xf32>
    %66 = arith.mulf %4, %65 : vector<1x128xf32>
    %67 = vector.broadcast %66 : vector<1x128xf32> to vector<16x128xf32>
    %68 = arith.mulf %49, %67 : vector<16x128xf32>
    %69 = arith.mulf %56, %66 : vector<1x128xf32>
    %70 = arith.subf %5, %69 : vector<1x128xf32>
    %71 = vector.broadcast %70 : vector<1x128xf32> to vector<16x128xf32>
    %72 = arith.addf %68, %71 : vector<16x128xf32>
    %73 = vector.broadcast %6 : vector<1x128xf32> to vector<16x128xf32>
    %74 = arith.mulf %72, %73 : vector<16x128xf32>
    %cst_31 = arith.constant dense<0.000000e+00> : vector<16xf32>
    %75 = vector.multi_reduction <add>, %74, %cst_31 [1] : vector<16x128xf32> to vector<16xf32>
    %76 = vector.shape_cast %75 : vector<16xf32> to vector<16x1xf32>
    %77 = vector.broadcast %7 : vector<1x1xf32> to vector<16x1xf32>
    %78 = arith.addf %76, %77 : vector<16x1xf32>
    %cst_32 = arith.constant 0.000000e+00 : f32
    %79 = vector.broadcast %cst_32 : f32 to vector<16x1xf32>
    %80 = arith.subf %79, %78 : vector<16x1xf32>
    %81 = math.exp %80 : vector<16x1xf32>
    %cst_33 = arith.constant 1.000000e+00 : f32
    %82 = vector.broadcast %cst_33 : f32 to vector<16x1xf32>
    %83 = arith.addf %82, %81 : vector<16x1xf32>
    %84 = tpu.reciprocal %83 {approx = true} : vector<16x1xf32> -> vector<16x1xf32>
    %c0_34 = arith.constant 0 : index
    %c0_35 = arith.constant 0 : index
    %85 = vector.load %arg5[%c0_34, %c0_35] : memref<16x1xf32, #tpu.memory_space<vmem>>, vector<16x1xf32>
    tpu.vector_store %arg5[%c0_34, %c0_35], %84 {strides = array<i32>} : memref<16x1xf32, #tpu.memory_space<vmem>>, vector<16x1xf32>,
    return
  }
}

</mosaic_0001>

<llo_original>
// kernel: discriminator_forward.1
$region0: #{discriminator_forward.1}
  #allocation0 [shape = 'u32[]', space=smem, size = 0x4, offset = 0x4, fixed_abs, tag = 'smem constant byte address 0x4 - core index']
  #allocation1 [shape = 'u32[144,128]{1,0:T(1,128)}', space=vmem, size = 0x12000, scoped, tag = 'internal scratch']
  %s0 = inlined_call_operand.hbm [shape: f32[16,16], index: 0, kind: input, shape index: {}]
  %s1 = inlined_call_operand.hbm [shape: f32[16,16], index: 1, kind: input, shape index: {}]
  %s2 = inlined_call_operand.hbm [shape: bf16[32,256], index: 2, kind: input, shape index: {}]
  %s3 = inlined_call_operand.hbm [shape: bf16[256,128], index: 3, kind: input, shape index: {}]
  %s4 = inlined_call_operand.hbm [shape: f32[8,256], index: 4, kind: input, shape index: {}]
  %s5 = inlined_call_operand.vmem [shape: f32[16,1], index: 5, kind: output, shape index: {}]
  %s6 = sld [smem:[#allocation0]]
  $region50: #{discriminator_forward.1} parent=0
    _
  %s8 = ssub.s32 1, %s6
  %s9 = scalar_select 0, %s8, %s6
  $region1: #{discriminator_forward.1} parent=0
    #allocation2 [shape = 'u8[8192]{0}', space=vmem, size = 0x2000, scoped, tag = 'input window, operand 0, single buffered']
    #allocation3 [shape = 's32[1]{0}', space=sflag, size = 0x4, scoped, tag = 'scoped memory for discriminator_forward.1']
    #allocation4 [shape = 'u8[8192]{0}', space=vmem, size = 0x2000, scoped, tag = 'input window, operand 1, single buffered']
    #allocation5 [shape = 's32[1]{0}', space=sflag, size = 0x4, scoped, tag = 'scoped memory for discriminator_forward.1']
    #allocation6 [shape = 'u8[16384]{0}', space=vmem, size = 0x4000, scoped, tag = 'input window, operand 2, single buffered']
    #allocation7 [shape = 'u8[65536]{0}', space=vmem, size = 0x10000, scoped, tag = 'input window, operand 3, single buffered']
    #allocation8 [shape = 's32[1]{0}', space=sflag, size = 0x4, scoped, tag = 'scoped memory for discriminator_forward.1']
    #allocation9 [shape = 'u8[8192]{0}', space=vmem, size = 0x2000, scoped, tag = 'input window, operand 4, single buffered']
    %10 = vsyncpa [#allocation3], 0
    %11 = vsyncpa [#allocation5], 0
    %12 = vsyncpa [#allocation8], 0
    // Predicated region
    $region2: #{discriminator_forward.1} parent=1 // pred_check
      _
    $region3: #{discriminator_forward.1} parent=1 // pred_check_branch
      %14 = sbr.rel (0) target = $region5
    $region4: #{discriminator_forward.1} parent=1 // pred_region
      %s16 = ssub.s32 256, 256
      %17 = vsyncadd [#allocation3], %s16
      %s18 = sshll.u32 [#allocation2], 4
      %s19 = int_to_ptr.vmem [resolvable:$true] %s18
      %24 = dma.hbm_to_vmem [thread:$0]  %s0, 256, %s19, [#allocation3], 128, 128, 8
    $region5: #{discriminator_forward.1} parent=1 // pred_fallthru
      _
    // Predicated region
    $region6: #{discriminator_forward.1} parent=1 // pred_check
      _
    $region7: #{discriminator_forward.1} parent=1 // pred_check_branch
      %26 = sbr.rel (0) target = $region9
    $region8: #{discriminator_forward.1} parent=1 // pred_region
      %s28 = ssub.s32 256, 256
      %29 = vsyncadd [#allocation5], %s28
      %s30 = sshll.u32 [#allocation4], 4
      %s31 = int_to_ptr.vmem [resolvable:$true] %s30
      %36 = dma.hbm_to_vmem [thread:$0]  %s1, 256, %s31, [#allocation5], 128, 128, 8
    $region9: #{discriminator_forward.1} parent=1 // pred_fallthru
      _
    // Predicated region
    $region10: #{discriminator_forward.1} parent=1 // pred_check
      _
    $region11: #{discriminator_forward.1} parent=1 // pred_check_branch
      %38 = sbr.rel (0) target = $region13
    $region12: #{discriminator_forward.1} parent=1 // pred_region
      %s40 = ssub.s32 512, 512
      %41 = vsyncadd [#allocation5], %s40
      %s42 = sshll.u32 [#allocation6], 4
      %s43 = int_to_ptr.vmem [resolvable:$true] %s42
      %48 = dma.hbm_to_vmem [thread:$0]  %s2, 512, %s43, [#allocation5], 128, 128, 8
    $region13: #{discriminator_forward.1} parent=1 // pred_fallthru
      _
    // Predicated region
    $region14: #{discriminator_forward.1} parent=1 // pred_check
      _
    $region15: #{discriminator_forward.1} parent=1 // pred_check_branch
      %50 = sbr.rel (0) target = $region17
    $region16: #{discriminator_forward.1} parent=1 // pred_region
      %s52 = ssub.s32 2048, 2048
      %53 = vsyncadd [#allocation8], %s52
      %s54 = sshll.u32 [#allocation7], 4
      %s55 = int_to_ptr.vmem [resolvable:$true] %s54
      %60 = dma.hbm_to_vmem [thread:$0]  %s3, 2048, %s55, [#allocation8], 64, 64, 4
    $region17: #{discriminator_forward.1} parent=1 // pred_fallthru
      _
    // Predicated region
    $region18: #{discriminator_forward.1} parent=1 // pred_check
      _
    $region19: #{discriminator_forward.1} parent=1 // pred_check_branch
      %62 = sbr.rel (0) target = $region21
    $region20: #{discriminator_forward.1} parent=1 // pred_region
      %s64 = ssub.s32 256, 256
      %65 = vsyncadd [#allocation8], %s64
      %s67 = sshll.u32 [#allocation9], 4
      %s68 = int_to_ptr.vmem [resolvable:$true] %s67
      %70 = dma.hbm_to_vmem [thread:$0]  %s4, 256, %s68, [#allocation8]
    $region21: #{discriminator_forward.1} parent=1 // pred_fallthru
      _
    // Predicated region
    $region22: #{discriminator_forward.1} parent=1 // pred_check
      _
    $region23: #{discriminator_forward.1} parent=1 // pred_check_branch
      %72 = sbr.rel (0) target = $region25
    $region24: #{discriminator_forward.1} parent=1 // pred_region
      %73 = dma.done [#allocation3], 256
    $region25: #{discriminator_forward.1} parent=1 // pred_fallthru
      _
    // Predicated region
    $region26: #{discriminator_forward.1} parent=1 // pred_check
      _
    $region27: #{discriminator_forward.1} parent=1 // pred_check_branch
      %75 = sbr.rel (0) target = $region29
    $region28: #{discriminator_forward.1} parent=1 // pred_region
      %76 = dma.done [#allocation5], 256
    $region29: #{discriminator_forward.1} parent=1 // pred_fallthru
      _
    // Predicated region
    $region30: #{discriminator_forward.1} parent=1 // pred_check
      _
    $region31: #{discriminator_forward.1} parent=1 // pred_check_branch
      %78 = sbr.rel (0) target = $region33
    $region32: #{discriminator_forward.1} parent=1 // pred_region
      %79 = dma.done [#allocation5], 512
    $region33: #{discriminator_forward.1} parent=1 // pred_fallthru
      _
    // Predicated region
    $region34: #{discriminator_forward.1} parent=1 // pred_check
      _
    $region35: #{discriminator_forward.1} parent=1 // pred_check_branch
      %81 = sbr.rel (0) target = $region37
    $region36: #{discriminator_forward.1} parent=1 // pred_region
      %82 = dma.done [#allocation8], 2048
    $region37: #{discriminator_forward.1} parent=1 // pred_fallthru
      _
    // Predicated region
    $region38: #{discriminator_forward.1} parent=1 // pred_check
      _
    $region39: #{discriminator_forward.1} parent=1 // pred_check_branch
      %84 = sbr.rel (0) target = $region41
    $region40: #{discriminator_forward.1} parent=1 // pred_region
      %85 = dma.done [#allocation8], 256
    $region41: #{discriminator_forward.1} parent=1 // pred_fallthru
      _
    %v87 = vld [vmem:[#allocation9] ss:$8 sm:$0x3]
    %s88 = scalar_lea.vmem [#allocation9], 1
    %v89 = vld [vmem:[%s88] ss:$8 sm:$0x3]
    %s90 = scalar_lea.vmem [#allocation9], 2
    %v91 = vld [vmem:[%s90] ss:$8 sm:$0x3]
    %v92 = vld [vmem:[#allocation9 + $0x3] ss:$0 sm:$0xff]
    %v93 = vld [vmem:[#allocation9 + $0x4] ss:$0 sm:$0xff]
    %v94 = vld [vmem:[#allocation9 + $0x5] ss:$0 sm:$0xff]
    %v95 = vld [vmem:[#allocation9 + $0x6] ss:$0 sm:$0xff]
    %v96 = vld [vmem:[#allocation9 + $0x7] ss:$0 sm:$0xff]
    %v97 = vld [vmem:[#allocation2] sm:$0xff]
    %v98 = vld [vmem:[#allocation2 + $0x8] sm:$0xff]
    %v99 = vld [vmem:[#allocation4] sm:$0xff]
    %v100 = vld [vmem:[#allocation4 + $0x8] sm:$0xff]
    %103 = vrot.lane.b32.xlu0 %v99, 16
    %v104 = vpop.permute.xlu0 %103
    %105 = vrot.lane.b32.xlu0 %v100, 16
    %v106 = vpop.permute.xlu0 %105
    %vm109 = vcmask 130048
    %v110 = vsel %vm109, %v97, %v104
    %v111 = vsel %vm109, %v98, %v106
    %v112 = vpack.c.bf16 %v111, %v110
    %v113 = vld [vmem:[#allocation6] sm:$0xff]
    %v114 = vld [vmem:[#allocation6 + $0x8] sm:$0xff]
    %v115 = vld [vmem:[#allocation6 + $0x10] sm:$0xff]
    %v116 = vld [vmem:[#allocation6 + $0x18] sm:$0xff]
    %v118 = vlaneseq
    %v119 = vshrl.u32 %v118, 7
    %v120 = vsub.s32 0, %v119
    %v121 = vrot.slane %v87, %v120
    %v122 = vlaneseq
    %v123 = vshrl.u32 %v122, 7
    %v124 = vsub.s32 1, %v123
    %v125 = vrot.slane %v87, %v124
    %v132 = vunpack.c.l.b16 %v113
    %v133 = vunpack.c.h.b16 %v113
    %v134 = vunpack.c.l.b16 %v114
    %v135 = vunpack.c.h.b16 %v114
    %v136 = vunpack.c.l.b16 %v115
    %v137 = vunpack.c.h.b16 %v115
    %v138 = vunpack.c.l.b16 %v116
    %v139 = vunpack.c.h.b16 %v116
    %v140 = vpack.c.b16 %v134, %v132
    %v141 = vpack.c.b16 %v135, %v133
    %v142 = vpack.c.b16 %v138, %v136
    %v143 = vpack.c.b16 %v139, %v137
    %vm148 = vcmask 261120
    %v150 = vsel %vm148, %v112, 0
    %152 = vmatprep.subr.bf16.mxu0 %v141
    %153 = vmatpush1.bf16.msra.mxu0 %v140
    %154 = vmatprep.subr.bf16.mxu0 %v143
    %155 = vmatpush1.bf16.msra.mxu0 %v142
    %156 = vmatprep.subr.bf16.mxu0 0
    %157 = vmatpush1.bf16.msra.mxu0 0
    %158 = vmatprep.subr.bf16.mxu0 0
    %159 = vmatpush1.bf16.msra.mxu0 0
    %160 = vmatprep.subr.bf16.mxu0 0
    %161 = vmatpush1.bf16.msra.mxu0 0
    %162 = vmatprep.subr.bf16.mxu0 0
    %163 = vmatpush1.bf16.msra.mxu0 0
    %164 = vmatprep.subr.bf16.mxu0 0
    %165 = vmatpush1.bf16.msra.mxu0 0
    %166 = vmatprep.subr.bf16.mxu0 0
    %167 = vmatpush1.bf16.msra.mxu0 0
    %168 = vmatprep.subr.bf16.mxu0 0
    %169 = vmatpush1.bf16.msra.mxu0 0
    %170 = vmatprep.subr.bf16.mxu0 0
    %171 = vmatpush1.bf16.msra.mxu0 0
    %172 = vmatprep.subr.bf16.mxu0 0
    %173 = vmatpush1.bf16.msra.mxu0 0
    %174 = vmatprep.subr.bf16.mxu0 0
    %175 = vmatpush1.bf16.msra.mxu0 0
    %176 = vmatprep.subr.bf16.mxu0 0
    %177 = vmatpush1.bf16.msra.mxu0 0
    %178 = vmatprep.subr.bf16.mxu0 0
    %179 = vmatpush1.bf16.msra.mxu0 0
    %180 = vmatprep.subr.bf16.mxu0 0
    %181 = vmatpush1.bf16.msra.mxu0 0
    %182 = vmatprep.subr.bf16.mxu0 0
    %183 = vmatpush1.bf16.msra.mxu0 0
    %184 = vmatprep.mubr.bf16.mxu0 0
    %185 = vmatmul.mubr.bf16.gmra.mrb[0].mxu0 %v150
    %v186 = vpop.f32.mrb[0].mxu0
    %v187 = vadd.f32 %v121, %v186
    %v188 = vpop.f32.mrb[0].mxu0
    %v189 = vadd.f32 %v125, %v188
    %v190 = vpop.f32.mrb[0].mxu0
    %v191 = vadd.f32 %v121, %v190
    %v192 = vpop.f32.mrb[0].mxu0
    %v193 = vadd.f32 %v125, %v192
    %194 = vdwg.mxu0
    %v195 = vmul.f32 %v187, 0.2
    %v196 = vmul.f32 %v189, 0.2
    %v197 = vmul.f32 %v191, 0.2
    %v198 = vmul.f32 %v193, 0.2
    %v199 = vmax.f32 %v187, %v195
    %v200 = vmax.f32 %v189, %v196
    %v201 = vmax.f32 %v191, %v197
    %v202 = vmax.f32 %v193, %v198
    %v203 = vadd.f32 %v199, %v201
    %v204 = vrot.slane %v203, 4
    %v205 = vadd.f32 %v203, %v204
    %v206 = vrot.slane %v205, 2
    %v207 = vadd.f32 %v205, %v206
    %v208 = vrot.slane %v207, 1
    %v209 = vadd.f32 %v207, %v208
    %v210 = vadd.f32 %v200, %v202
    %v211 = vrot.slane %v210, 4
    %v212 = vadd.f32 %v210, %v211
    %v213 = vrot.slane %v212, 2
    %v214 = vadd.f32 %v212, %v213
    %v215 = vrot.slane %v214, 1
    %v216 = vadd.f32 %v214, %v215
    %v217 = vmul.f32 %v199, %v199
    %v218 = vmul.f32 %v200, %v200
    %v219 = vmul.f32 %v201, %v201
    %v220 = vmul.f32 %v202, %v202
    %v221 = vadd.f32 %v217, %v219
    %v222 = vrot.slane %v221, 4
    %v223 = vadd.f32 %v221, %v222
    %v224 = vrot.slane %v223, 2
    %v225 = vadd.f32 %v223, %v224
    %v226 = vrot.slane %v225, 1
    %v227 = vadd.f32 %v225, %v226
    %v228 = vadd.f32 %v218, %v220
    %v229 = vrot.slane %v228, 4
    %v230 = vadd.f32 %v228, %v229
    %v231 = vrot.slane %v230, 2
    %v232 = vadd.f32 %v230, %v231
    %v233 = vrot.slane %v232, 1
    %v234 = vadd.f32 %v232, %v233
    %v235 = vmul.f32 %v209, 0.0625
    %v236 = vmul.f32 %v216, 0.0625
    %v237 = vmul.f32 %v227, 0.0625
    %v238 = vmul.f32 %v234, 0.0625
    %v239 = vmul.f32 %v235, %v235
    %v240 = vmul.f32 %v236, %v236
    %v241 = vsub.f32 %v237, %v239
    %v242 = vsub.f32 %v238, %v240
    %v243 = vmax.f32 %v241, 0.0
    %v244 = vmax.f32 %v242, 0.0
    %v245 = vadd.f32 %v243, 1e-05
    %v246 = vadd.f32 %v244, 1e-05
    %v247 = vrsqrt.pop %v245
    %v248 = vrsqrt.pop %v246
    %v251 = vcombine.low %v247, %v248
    %v253 = vunpack.c.l.s4 1966171168
    %v254 = vunpack.c.0.s8 %v253
    %v255 = vlaneseq
    %v256 = vshrl.u32 %v255, 7
    %v257 = vsub.s32 %v254, %v256
    %v258 = vrot.slane %v251, %v257
    %v260 = vunpack.c.l.s4 1966171168
    %v261 = vunpack.c.0.s8 %v260
    %v262 = vlaneseq
    %v263 = vshrl.u32 %v262, 7
    %v264 = vsub.s32 %v261, %v263
    %v265 = vrot.slane %v258, %v264
    %v267 = vmul.f32 %v89, %v265
    %v269 = vlaneseq
    %v270 = vshrl.u32 %v269, 7
    %v271 = vsub.s32 0, %v270
    %v272 = vrot.slane %v267, %v271
    %v273 = vlaneseq
    %v274 = vshrl.u32 %v273, 7
    %v275 = vsub.s32 1, %v274
    %v276 = vrot.slane %v267, %v275
    %v279 = vmul.f32 %v199, %v272
    %v280 = vmul.f32 %v200, %v276
    %v281 = vmul.f32 %v201, %v272
    %v282 = vmul.f32 %v202, %v276
    %v283 = vmul.f32 %v235, %v272
    %v284 = vmul.f32 %v236, %v276
    %v287 = vcombine.low %v283, %v284
    %v289 = vunpack.c.l.s4 1966171168
    %v290 = vunpack.c.0.s8 %v289
    %v291 = vlaneseq
    %v292 = vshrl.u32 %v291, 7
    %v293 = vsub.s32 %v290, %v292
    %v294 = vrot.slane %v287, %v293
    %v296 = vunpack.c.l.s4 1966171168
    %v297 = vunpack.c.0.s8 %v296
    %v298 = vlaneseq
    %v299 = vshrl.u32 %v298, 7
    %v300 = vsub.s32 %v297, %v299
    %v301 = vrot.slane %v294, %v300
    %v303 = vsub.f32 %v91, %v301
    %v305 = vlaneseq
    %v306 = vshrl.u32 %v305, 7
    %v307 = vsub.s32 0, %v306
    %v308 = vrot.slane %v303, %v307
    %v309 = vlaneseq
    %v310 = vshrl.u32 %v309, 7
    %v311 = vsub.s32 1, %v310
    %v312 = vrot.slane %v303, %v311
    %v315 = vadd.f32 %v279, %v308
    %v316 = vadd.f32 %v280, %v312
    %v317 = vadd.f32 %v281, %v308
    %v318 = vadd.f32 %v282, %v312
    %v319 = vpack.c.bf16 %v317, %v315
    %v320 = vpack.c.bf16 %v318, %v316
    %v321 = vld [vmem:[#allocation7] sm:$0xf]
    %v322 = vld [vmem:[#allocation7 + $0x4] sm:$0xf]
    %v323 = vld [vmem:[#allocation7 + $0x8] sm:$0xf]
    %v324 = vld [vmem:[#allocation7 + $0xc] sm:$0xf]
    %v325 = vld [vmem:[#allocation7 + $0x10] sm:$0xf]
    %v326 = vld [vmem:[#allocation7 + $0x14] sm:$0xf]
    %v327 = vld [vmem:[#allocation7 + $0x18] sm:$0xf]
    %v328 = vld [vmem:[#allocation7 + $0x1c] sm:$0xf]
    %v329 = vld [vmem:[#allocation7 + $0x20] sm:$0xf]
    %v330 = vld [vmem:[#allocation7 + $0x24] sm:$0xf]
    %v331 = vld [vmem:[#allocation7 + $0x28] sm:$0xf]
    %v332 = vld [vmem:[#allocation7 + $0x2c] sm:$0xf]
    %v333 = vld [vmem:[#allocation7 + $0x30] sm:$0xf]
    %v334 = vld [vmem:[#allocation7 + $0x34] sm:$0xf]
    %v335 = vld [vmem:[#allocation7 + $0x38] sm:$0xf]
    %v336 = vld [vmem:[#allocation7 + $0x3c] sm:$0xf]
    %v337 = vld [vmem:[#allocation7 + $0x40] sm:$0xf]
    %v338 = vld [vmem:[#allocation7 + $0x44] sm:$0xf]
    %v339 = vld [vmem:[#allocation7 + $0x48] sm:$0xf]
    %v340 = vld [vmem:[#allocation7 + $0x4c] sm:$0xf]
    %v341 = vld [vmem:[#allocation7 + $0x50] sm:$0xf]
    %v342 = vld [vmem:[#allocation7 + $0x54] sm:$0xf]
    %v343 = vld [vmem:[#allocation7 + $0x58] sm:$0xf]
    %v344 = vld [vmem:[#allocation7 + $0x5c] sm:$0xf]
    %v345 = vld [vmem:[#allocation7 + $0x60] sm:$0xf]
    %v346 = vld [vmem:[#allocation7 + $0x64] sm:$0xf]
    %v347 = vld [vmem:[#allocation7 + $0x68] sm:$0xf]
    %v348 = vld [vmem:[#allocation7 + $0x6c] sm:$0xf]
    %v349 = vld [vmem:[#allocation7 + $0x70] sm:$0xf]
    %v350 = vld [vmem:[#allocation7 + $0x74] sm:$0xf]
    %v351 = vld [vmem:[#allocation7 + $0x78] sm:$0xf]
    %v352 = vld [vmem:[#allocation7 + $0x7c] sm:$0xf]
    %v385 = vunpack.c.l.b16 %v321
    %v386 = vunpack.c.l.b16 %v322
    %v387 = vunpack.c.l.b16 %v323
    %v388 = vunpack.c.l.b16 %v324
    %v389 = vunpack.c.l.b16 %v325
    %v390 = vunpack.c.l.b16 %v326
    %v391 = vunpack.c.l.b16 %v327
    %v392 = vunpack.c.l.b16 %v328
    %v393 = vunpack.c.l.b16 %v329
    %v394 = vunpack.c.l.b16 %v330
    %v395 = vunpack.c.l.b16 %v331
    %v396 = vunpack.c.l.b16 %v332
    %v397 = vunpack.c.l.b16 %v333
    %v398 = vunpack.c.l.b16 %v334
    %v399 = vunpack.c.l.b16 %v335
    %v400 = vunpack.c.l.b16 %v336
    %v401 = vunpack.c.l.b16 %v337
    %v402 = vunpack.c.l.b16 %v338
    %v403 = vunpack.c.l.b16 %v339
    %v404 = vunpack.c.l.b16 %v340
    %v405 = vunpack.c.l.b16 %v341
    %v406 = vunpack.c.l.b16 %v342
    %v407 = vunpack.c.l.b16 %v343
    %v408 = vunpack.c.l.b16 %v344
    %v409 = vunpack.c.l.b16 %v345
    %v410 = vunpack.c.l.b16 %v346
    %v411 = vunpack.c.l.b16 %v347
    %v412 = vunpack.c.l.b16 %v348
    %v413 = vunpack.c.l.b16 %v349
    %v414 = vunpack.c.l.b16 %v350
    %v415 = vunpack.c.l.b16 %v351
    %v416 = vunpack.c.l.b16 %v352
    %v417 = vpack.c.b16 %v386, %v385
    %v418 = vpack.c.b16 %v388, %v387
    %v419 = vpack.c.b16 %v390, %v389
    %v420 = vpack.c.b16 %v392, %v391
    %v421 = vpack.c.b16 %v394, %v393
    %v422 = vpack.c.b16 %v396, %v395
    %v423 = vpack.c.b16 %v398, %v397
    %v424 = vpack.c.b16 %v400, %v399
    %v425 = vpack.c.b16 %v402, %v401
    %v426 = vpack.c.b16 %v404, %v403
    %v427 = vpack.c.b16 %v406, %v405
    %v428 = vpack.c.b16 %v408, %v407
    %v429 = vpack.c.b16 %v410, %v409
    %v430 = vpack.c.b16 %v412, %v411
    %v431 = vpack.c.b16 %v414, %v413
    %v432 = vpack.c.b16 %v416, %v415
    %449 = vmatprep.subr.bf16.mxu0 0
    %450 = vmatpush1.bf16.msra.mxu0 %v417
    %451 = vmatprep.subr.bf16.mxu0 0
    %452 = vmatpush1.bf16.msra.mxu0 %v418
    %453 = vmatprep.subr.bf16.mxu0 0
    %454 = vmatpush1.bf16.msra.mxu0 %v419
    %455 = vmatprep.subr.bf16.mxu0 0
    %456 = vmatpush1.bf16.msra.mxu0 %v420
    %457 = vmatprep.subr.bf16.mxu0 0
    %458 = vmatpush1.bf16.msra.mxu0 %v421
    %459 = vmatprep.subr.bf16.mxu0 0
    %460 = vmatpush1.bf16.msra.mxu0 %v422
    %461 = vmatprep.subr.bf16.mxu0 0
    %462 = vmatpush1.bf16.msra.mxu0 %v423
    %463 = vmatprep.subr.bf16.mxu0 0
    %464 = vmatpush1.bf16.msra.mxu0 %v424
    %465 = vmatprep.subr.bf16.mxu0 0
    %466 = vmatpush1.bf16.msra.mxu0 %v425
    %467 = vmatprep.subr.bf16.mxu0 0
    %468 = vmatpush1.bf16.msra.mxu0 %v426
    %469 = vmatprep.subr.bf16.mxu0 0
    %470 = vmatpush1.bf16.msra.mxu0 %v427
    %471 = vmatprep.subr.bf16.mxu0 0
    %472 = vmatpush1.bf16.msra.mxu0 %v428
    %473 = vmatprep.subr.bf16.mxu0 0
    %474 = vmatpush1.bf16.msra.mxu0 %v429
    %475 = vmatprep.subr.bf16.mxu0 0
    %476 = vmatpush1.bf16.msra.mxu0 %v430
    %477 = vmatprep.subr.bf16.mxu0 0
    %478 = vmatpush1.bf16.msra.mxu0 %v431
    %479 = vmatprep.subr.bf16.mxu0 0
    %480 = vmatpush1.bf16.msra.mxu0 %v432
    %481 = vmatprep.mubr.bf16.mxu0 %v320
    %482 = vmatmul.mubr.bf16.gmra.mrb[0].mxu0 %v319
    %v483 = vpop.f32.mrb[0].mxu0
    %v484 = vadd.f32 %v92, %v483
    %v485 = vpop.f32.mrb[0].mxu0
    %v486 = vpop.f32.mrb[0].mxu0
    %v487 = vadd.f32 %v92, %v486
    %v488 = vpop.f32.mrb[0].mxu0
    %489 = vdwg.mxu0
    %v490 = vmul.f32 %v484, 0.2
    %v491 = vmul.f32 %v487, 0.2
    %v492 = vmax.f32 %v484, %v490
    %v493 = vmax.f32 %v487, %v491
    %v494 = vadd.f32 %v492, %v493
    %v495 = vrot.slane %v494, 4
    %v496 = vadd.f32 %v494, %v495
    %v497 = vrot.slane %v496, 2
    %v498 = vadd.f32 %v496, %v497
    %v499 = vrot.slane %v498, 1
    %v500 = vadd.f32 %v498, %v499
    %v501 = vmul.f32 %v492, %v492
    %v502 = vmul.f32 %v493, %v493
    %v503 = vadd.f32 %v501, %v502
    %v504 = vrot.slane %v503, 4
    %v505 = vadd.f32 %v503, %v504
    %v506 = vrot.slane %v505, 2
    %v507 = vadd.f32 %v505, %v506
    %v508 = vrot.slane %v507, 1
    %v509 = vadd.f32 %v507, %v508
    %v510 = vmul.f32 %v500, 0.0625
    %v511 = vmul.f32 %v509, 0.0625
    %v512 = vmul.f32 %v510, %v510
    %v513 = vsub.f32 %v511, %v512
    %v514 = vmax.f32 %v513, 0.0
    %v515 = vadd.f32 %v514, 1e-05
    %v516 = vrsqrt.pop %v515
    %v517 = vmul.f32 %v93, %v516
    %v518 = vmul.f32 %v492, %v517
    %v519 = vmul.f32 %v493, %v517
    %v520 = vmul.f32 %v510, %v517
    %v521 = vsub.f32 %v94, %v520
    %v522 = vadd.f32 %v518, %v521
    %v523 = vadd.f32 %v519, %v521
    %v524 = vmul.f32 %v522, %v95
    %v525 = vmul.f32 %v523, %v95
    %526 = vadd.xlane.f32.xlu0 %v524
    %v527 = vpop.xlane.xlu0 %526
    %528 = vadd.xlane.f32.xlu0 %v525
    %v529 = vpop.xlane.xlu0 %528
    %v530 = vadd.f32 %v527, %v96
    %v531 = vadd.f32 %v529, %v96
    %v532 = vsub.f32 0.0, %v530
    %v533 = vsub.f32 0.0, %v531
    %v534 = vmul.f32 %v532, 1.442695
    %v535 = vpow.pop %v534
    %v536 = vmul.f32 %v533, 1.442695
    %v537 = vpow.pop %v536
    %v538 = vadd.f32 %v535, 1.0
    %v539 = vadd.f32 %v537, 1.0
    %v540 = vrcp.pop %v538
    %v541 = vrcp.pop %v539
    %vm542 = vcmask 7168
    %543 = vst.msk [vmem:[%s5] sm:$0xff] %vm542, %v540
    %544 = vst.msk [vmem:[%s5 + $0x8] sm:$0xff] %vm542, %v541
    // Predicated region
    $region42: #{discriminator_forward.1} parent=1 // pred_check
      _
    $region43: #{discriminator_forward.1} parent=1 // pred_check_branch
      %546 = sbr.rel (0) target = $region45
    $region44: #{discriminator_forward.1} parent=1 // pred_region
      _
    $region45: #{discriminator_forward.1} parent=1 // pred_fallthru
      _
    // Predicated region
    $region46: #{discriminator_forward.1} parent=1 // pred_check
      _
    $region47: #{discriminator_forward.1} parent=1 // pred_check_branch
      %548 = sbr.rel (0) target = $region49
    $region48: #{discriminator_forward.1} parent=1 // pred_region
      _
    $region49: #{discriminator_forward.1} parent=1 // pred_fallthru
      _
    %549 = vsyncpa [#allocation3], 1
    %550 = vsyncpa [#allocation5], 1
    %551 = vsyncpa [#allocation8], 1

</llo_original>
